<compile_context>
chip_gen: v6e
topology: v6e:2x2x1
jax: 0.10.0
libtpu: 0.0.40
codegen_flags: <defaults>
</compile_context>

<pallas_src>
import functools
import math

import jax
import jax.numpy as jnp
from jax import lax
from jax.experimental import pallas as pl
from jax.experimental.pallas import tpu as pltpu


def _round_up(x, m):
    return ((x + m - 1) // m) * m


def _cp(sems):
    return pltpu.CompilerParams(dimension_semantics=sems,
                                vmem_limit_bytes=32 * 1024 * 1024)


def _group_onehot(c, g):
    ch = jnp.arange(c) // (c // g)
    return (ch[:, None] == jnp.arange(g)[None, :]).astype(jnp.float32)  # (C, G)


# ----------------------------------------------------------------------------
# In-kernel helpers
# ----------------------------------------------------------------------------

def _group_affine(s, sq, gsel, gamma, beta, cnt, eps):
    """Per-channel (scale, shift) from per-channel sums s/sq and one-hot gsel.

    gsel matmuls are tiny (1,C)x(C,G); kept on the MXU for lowering simplicity.
    """
    gs = jnp.dot(s, gsel, preferred_element_type=jnp.float32)      # (1, G)
    gsq = jnp.dot(sq, gsel, preferred_element_type=jnp.float32)    # (1, G)
    mean = lax.dot_general(gs, gsel, (((1,), (1,)), ((), ())),
                           preferred_element_type=jnp.float32) / cnt   # (1, C)
    msq = lax.dot_general(gsq, gsel, (((1,), (1,)), ((), ())),
                          preferred_element_type=jnp.float32) / cnt    # (1, C)
    var = msq - mean * mean
    inv = lax.rsqrt(var + eps)
    scale = inv * gamma
    shift = beta - mean * scale
    return scale, shift


# ----------------------------------------------------------------------------
# Pallas kernels
# ----------------------------------------------------------------------------

def _matmul_bias_kernel(a_ref, b_ref, bias_ref, o_ref):
    y = jnp.dot(a_ref[...].astype(jnp.bfloat16), b_ref[...],
                preferred_element_type=jnp.float32) + bias_ref[...]
    o_ref[...] = y.astype(o_ref.dtype)


def _matmul_bias_res_kernel(a_ref, b_ref, bias_ref, res_ref, o_ref):
    y = (jnp.dot(a_ref[...].astype(jnp.bfloat16), b_ref[...],
                 preferred_element_type=jnp.float32)
         + bias_ref[...] + res_ref[...].astype(jnp.float32))
    o_ref[...] = y.astype(o_ref.dtype)


def _gn_conv3x3_kernel(x_ref, gsel_ref, gamma_ref, beta_ref, w_ref, b_ref,
                       *rest, swish, eps, has_res):
    """Fused GroupNorm(+swish) + 3x3 stride-1 'same' conv (+optional residual).

    x_ref:   (1, H+2, W+2, Cin) zero-padded RAW activation, bf16
    gsel:    (Cin, G) one-hot channel->group, f32
    gamma/beta: (1, Cin) f32
    w_ref:   (9, Cin, Cout) bf16
    b_ref:   (1, Cout) f32
    res_ref (optional): (1, H, W, Cout) bf16
    o_ref:   (1, H, W, Cout) bf16
    """
    if has_res:
        res_ref, o_ref = rest
    else:
        (o_ref,) = rest
    _, hp, wp, cin = x_ref.shape
    ho, wo = hp - 2, wp - 2
    cout = o_ref.shape[-1]
    g = gsel_ref.shape[1]

    x = x_ref[0].astype(jnp.float32)                           # (Hp, Wp, Cin)
    row = lax.broadcasted_iota(jnp.int32, (hp, wp, 1), 0)
    col = lax.broadcasted_iota(jnp.int32, (hp, wp, 1), 1)
    interior = ((row >= 1) & (row <= ho) & (col >= 1) & (col <= wo))
    interior_f = interior.astype(jnp.float32)

    # GroupNorm statistics over the interior (== the unpadded image), f32.
    xm = (x * interior_f).reshape(hp * wp, cin)
    cnt = float(ho * wo * (cin // g))
    s = jnp.sum(xm, axis=0, keepdims=True)                     # (1, Cin)
    sq = jnp.sum(xm * xm, axis=0, keepdims=True)               # (1, Cin)
    scale, shift = _group_affine(s, sq, gsel_ref[...], gamma_ref[...],
                                 beta_ref[...], cnt, eps)

    xn = x * scale + shift
    if swish:
        xn = xn * (1.0 / (1.0 + jnp.exp(-xn)))
    # zero the halo again (affine+swish of padded zeros is nonzero) -> 'same' pad
    xn = (xn * interior_f).astype(jnp.bfloat16)

    # hoisted taps: 3 dx-shifted flattened planes, per-dy sublane row slices
    acc = jnp.zeros((ho * wo, cout), jnp.float32)
    for dx in range(3):
        plane = xn[:, dx:dx + wo, :].reshape(hp * wo, cin)     # ((H+2)*W, Cin)
        for dy in range(3):
            tap = plane[dy * wo:(dy + ho) * wo, :]             # (H*W, Cin)
            acc = acc + jnp.dot(tap, w_ref[dy * 3 + dx],
                                preferred_element_type=jnp.float32)
    y = acc + b_ref[...]
    if has_res:
        y = y + res_ref[0].reshape(ho * wo, cout).astype(jnp.float32)
    o_ref[0] = y.reshape(ho, wo, cout).astype(o_ref.dtype)


def _gn_qkv_kernel(x_ref, gsel_ref, gamma_ref, beta_ref, w_ref, b_ref, o_ref,
                   *, eps):
    """Fused GroupNorm (no swish) + q/k/v 1x1 projections for one image.

    x_ref: (1, HW, C) bf16, w_ref: (3, C, C) bf16, b_ref: (3, 1, C) f32
    o_ref: (1, 3, HW, C) bf16  -> layout directly consumable by flash attention.
    """
    x = x_ref[0].astype(jnp.float32)                           # (HW, C)
    hw, c = x.shape
    g = gsel_ref.shape[1]
    cnt = float(hw * (c // g))
    s = jnp.sum(x, axis=0, keepdims=True)
    sq = jnp.sum(x * x, axis=0, keepdims=True)
    scale, shift = _group_affine(s, sq, gsel_ref[...], gamma_ref[...],
                                 beta_ref[...], cnt, eps)
    xn = (x * scale + shift).astype(jnp.bfloat16)
    for t in range(3):
        o_ref[0, t] = (jnp.dot(xn, w_ref[t], preferred_element_type=jnp.float32)
                       + b_ref[t]).astype(o_ref.dtype)


def _flash_attn_kernel(q_ref, k_ref, v_ref, o_ref, m_sc, l_sc, acc_sc, *, scale):
    """KV-tiled online-softmax attention; kv axis is the innermost grid axis."""
    ki = pl.program_id(2)

    @pl.when(ki == 0)
    def _():
        m_sc[...] = jnp.full_like(m_sc, -jnp.inf)
        l_sc[...] = jnp.zeros_like(l_sc)
        acc_sc[...] = jnp.zeros_like(acc_sc)

    q = q_ref[0, 0]                                            # (tq, C) bf16
    k = k_ref[0, 0]
    v = v_ref[0, 0]
    s = lax.dot_general(q, k, (((1,), (1,)), ((), ())),
                        preferred_element_type=jnp.float32) * scale   # (tq, tk)
    m_prev = m_sc[...]
    m_new = jnp.maximum(m_prev, jnp.max(s, axis=-1, keepdims=True))
    alpha = jnp.exp(m_prev - m_new)
    p = jnp.exp(s - m_new)
    l_sc[...] = alpha * l_sc[...] + jnp.sum(p, axis=-1, keepdims=True)
    acc_sc[...] = alpha * acc_sc[...] + jnp.dot(
        p.astype(jnp.bfloat16), v, preferred_element_type=jnp.float32)
    m_sc[...] = m_new

    @pl.when(ki == pl.num_programs(2) - 1)
    def _():
        o_ref[0] = (acc_sc[...] * pl.reciprocal(l_sc[...], approx=True)
                    ).astype(o_ref.dtype)


def _vq_kernel(z_ref, e_ref, esq_ref, idx_ref):
    """Nearest-codebook argmin indices.  |z|^2 dropped (constant per row)."""
    z = z_ref[...]                                             # (tm, D) bf16
    e = e_ref[...]                                             # (n_e, D) bf16
    cross = lax.dot_general(z, e, (((1,), (1,)), ((), ())),
                            preferred_element_type=jnp.float32)    # (tm, n_e)
    d = esq_ref[...] - 2.0 * cross
    n_e = d.shape[1]
    iota = lax.broadcasted_iota(jnp.int32, d.shape, 1)
    min_d = jnp.min(d, axis=1, keepdims=True)
    # first index achieving the minimum (matches torch.argmin tie-breaking)
    idx_ref[...] = jnp.min(jnp.where(d <= min_d, iota, n_e), axis=1, keepdims=True)


# ----------------------------------------------------------------------------
# Wrappers
# ----------------------------------------------------------------------------

def matmul_bias(a, b, bias, residual=None, tm=512):
    """a: (M, K), b: (K, N), bias: (N,) [, residual (M, N)] -> (M, N) bf16."""
    M, K = a.shape
    _, N = b.shape
    Mp = _round_up(M, 8)
    a = a.astype(jnp.bfloat16)
    if Mp != M:
        a = jnp.pad(a, ((0, Mp - M), (0, 0)))
    tm = min(tm, Mp)
    bb = b.astype(jnp.bfloat16)
    bias2 = bias.reshape(1, N).astype(jnp.float32)
    in_specs = [pl.BlockSpec((tm, K), lambda i: (i, 0)),
                pl.BlockSpec((K, N), lambda i: (0, 0)),
                pl.BlockSpec((1, N), lambda i: (0, 0))]
    args = [a, bb, bias2]
    if residual is not None:
        r = residual.astype(jnp.bfloat16)
        if Mp != M:
            r = jnp.pad(r, ((0, Mp - M), (0, 0)))
        in_specs.append(pl.BlockSpec((tm, N), lambda i: (i, 0)))
        args.append(r)
        kern = _matmul_bias_res_kernel
    else:
        kern = _matmul_bias_kernel
    out = pl.pallas_call(
        kern,
        out_shape=jax.ShapeDtypeStruct((Mp, N), jnp.bfloat16),
        grid=(pl.cdiv(Mp, tm),),
        in_specs=in_specs,
        out_specs=pl.BlockSpec((tm, N), lambda i: (i, 0)),
        compiler_params=_cp(("parallel",)),
    )(*args)
    return out[:M] if Mp != M else out


def gn_conv3x3(x, normp, convp, groups, residual=None, swish=True, eps=1e-6):
    """Fused GroupNorm(+swish) + 3x3 'same' conv.  x: (N, H, W, Cin) bf16."""
    N, H, W, Cin = x.shape
    Cout = convp["w"].shape[3]
    xp = jnp.pad(x, ((0, 0), (1, 1), (1, 1), (0, 0)))
    Hp, Wp = H + 2, W + 2
    gsel = _group_onehot(Cin, groups)
    gamma = normp["gamma"].reshape(1, Cin).astype(jnp.float32)
    beta = normp["beta"].reshape(1, Cin).astype(jnp.float32)
    w9 = convp["w"].reshape(9, Cin, Cout).astype(jnp.bfloat16)
    b2 = convp["b"].reshape(1, Cout).astype(jnp.float32)
    in_specs = [
        pl.BlockSpec((1, Hp, Wp, Cin), lambda i: (i, 0, 0, 0)),
        pl.BlockSpec((Cin, groups), lambda i: (0, 0)),
        pl.BlockSpec((1, Cin), lambda i: (0, 0)),
        pl.BlockSpec((1, Cin), lambda i: (0, 0)),
        pl.BlockSpec((9, Cin, Cout), lambda i: (0, 0, 0)),
        pl.BlockSpec((1, Cout), lambda i: (0, 0)),
    ]
    args = [xp, gsel, gamma, beta, w9, b2]
    has_res = residual is not None
    if has_res:
        in_specs.append(pl.BlockSpec((1, H, W, Cout), lambda i: (i, 0, 0, 0)))
        args.append(residual.astype(jnp.bfloat16))
    # TODO(synk): at production resolutions, tile output rows (2-row halo via an
    # extra grid axis / manual DMA) and switch GN to a two-pass stats+apply so a
    # single block stays within v7x's 64 MiB VMEM and the grid gets longer than N.
    return pl.pallas_call(
        functools.partial(_gn_conv3x3_kernel, swish=swish, eps=eps,
                          has_res=has_res),
        out_shape=jax.ShapeDtypeStruct((N, H, W, Cout), jnp.bfloat16),
        grid=(N,),
        in_specs=in_specs,
        out_specs=pl.BlockSpec((1, H, W, Cout), lambda i: (i, 0, 0, 0)),
        compiler_params=_cp(("parallel",)),
    )(*args)


def flash_attention(qkv, scale, tq=128, tk=128):
    """qkv: (N, 3, HW, C) bf16 -> (N, HW, C) bf16."""
    N, _, HW, C = qkv.shape
    tq = min(tq, HW)
    tk = min(tk, HW)
    assert HW % tq == 0 and HW % tk == 0
    return pl.pallas_call(
        functools.partial(_flash_attn_kernel, scale=scale),
        out_shape=jax.ShapeDtypeStruct((N, HW, C), jnp.bfloat16),
        grid=(N, HW // tq, HW // tk),
        in_specs=[
            pl.BlockSpec((1, 1, tq, C), lambda b, qi, ki: (b, 0, qi, 0)),
            pl.BlockSpec((1, 1, tk, C), lambda b, qi, ki: (b, 1, ki, 0)),
            pl.BlockSpec((1, 1, tk, C), lambda b, qi, ki: (b, 2, ki, 0)),
        ],
        out_specs=pl.BlockSpec((1, tq, C), lambda b, qi, ki: (b, qi, 0)),
        scratch_shapes=[pltpu.VMEM((tq, 1), jnp.float32),
                        pltpu.VMEM((tq, 1), jnp.float32),
                        pltpu.VMEM((tq, C), jnp.float32)],
        compiler_params=_cp(("parallel", "parallel", "arbitrary")),
    )(qkv, qkv, qkv)


def vector_quantize(z, codebook, tm=512):
    """Nearest-codebook quantization; returns exact f32 codebook rows."""
    N, H, W, D = z.shape
    M = N * H * W
    n_e = codebook.shape[0]
    zf = z.reshape(M, D).astype(jnp.bfloat16)
    Mp = _round_up(M, 8)
    if Mp != M:
        zf = jnp.pad(zf, ((0, Mp - M), (0, 0)))
    tm = min(tm, Mp)
    e_bf = codebook.astype(jnp.bfloat16)
    e_sq = jnp.sum(codebook.astype(jnp.float32) ** 2, axis=1).reshape(1, n_e)
    # TODO(synk): for production codebooks (n_e in the thousands) add an n_e
    # reduction grid axis ('arbitrary') with running (min_d, argmin) scratch.
    idx = pl.pallas_call(
        _vq_kernel,
        out_shape=jax.ShapeDtypeStruct((Mp, 1), jnp.int32),
        grid=(pl.cdiv(Mp, tm),),
        in_specs=[
            pl.BlockSpec((tm, D), lambda i: (i, 0)),
            pl.BlockSpec((n_e, D), lambda i: (0, 0)),
            pl.BlockSpec((1, n_e), lambda i: (0, 0)),
        ],
        out_specs=pl.BlockSpec((tm, 1), lambda i: (i, 0)),
        compiler_params=_cp(("parallel",)),
    )(zf, e_bf, e_sq)
    idx = idx[:M, 0]
    zq = jnp.take(codebook, idx, axis=0)     # exact codebook rows (f32 gather)
    # forward of the straight-through estimator: z + (z_q - z).detach() == z_q
    return zq.reshape(N, H, W, D)


# ----------------------------------------------------------------------------
# Conv / block glue
# ----------------------------------------------------------------------------

def conv1x1(x, p, residual=None):
    N, H, W, C = x.shape
    cout = p["w"].shape[3]
    res = None if residual is None else residual.reshape(N * H * W, cout)
    y = matmul_bias(x.reshape(N * H * W, C), p["w"].reshape(C, cout), p["b"],
                    residual=res)
    return y.reshape(N, H, W, cout)


def conv3x3_im2col(x, p, stride, pad):
    """im2col + single K=9*Cin matmul (conv_in with Cin=3; stride-2 downsample).

    # TODO(synk): fold the stride-2 taps into a Pallas kernel (phase split)
    # instead of the wrapper im2col; only one downsample conv per level.
    """
    w, b = p["w"], p["b"]
    kh, kw, cin, cout = w.shape
    xp = jnp.pad(x, ((0, 0), pad[0], pad[1], (0, 0)))
    Ho = (xp.shape[1] - kh) // stride + 1
    Wo = (xp.shape[2] - kw) // stride + 1
    patches = []
    for dy in range(kh):
        for dx in range(kw):
            patches.append(xp[:, dy:dy + stride * Ho:stride,
                               dx:dx + stride * Wo:stride, :])
    pmat = jnp.concatenate(patches, axis=-1).reshape(x.shape[0] * Ho * Wo,
                                                     kh * kw * cin)
    y = matmul_bias(pmat, w.reshape(kh * kw * cin, cout), b)
    return y.reshape(x.shape[0], Ho, Wo, cout)


def resnet_block(x, p, groups):
    h = gn_conv3x3(x, p["norm1"], p["conv1"], groups, swish=True)
    # dropout: eval mode -> identity
    res = conv1x1(x, p["nin_shortcut"]) if "nin_shortcut" in p else x
    # residual add fused into the second conv's epilogue
    return gn_conv3x3(h, p["norm2"], p["conv2"], groups, residual=res, swish=True)


def attn_block(x, p, groups, eps=1e-6):
    N, H, W, C = x.shape
    HW = H * W
    gsel = _group_onehot(C, groups)
    gamma = p["norm"]["gamma"].reshape(1, C).astype(jnp.float32)
    beta = p["norm"]["beta"].reshape(1, C).astype(jnp.float32)
    w_qkv = jnp.stack([p["q"]["w"].reshape(C, C),
                       p["k"]["w"].reshape(C, C),
                       p["v"]["w"].reshape(C, C)], axis=0).astype(jnp.bfloat16)
    b_qkv = jnp.stack([p["q"]["b"].reshape(1, C),
                       p["k"]["b"].reshape(1, C),
                       p["v"]["b"].reshape(1, C)], axis=0).astype(jnp.float32)
    x2 = x.reshape(N, HW, C)
    qkv = pl.pallas_call(
        functools.partial(_gn_qkv_kernel, eps=eps),
        out_shape=jax.ShapeDtypeStruct((N, 3, HW, C), jnp.bfloat16),
        grid=(N,),
        in_specs=[
            pl.BlockSpec((1, HW, C), lambda i: (i, 0, 0)),
            pl.BlockSpec((C, groups), lambda i: (0, 0)),
            pl.BlockSpec((1, C), lambda i: (0, 0)),
            pl.BlockSpec((1, C), lambda i: (0, 0)),
            pl.BlockSpec((3, C, C), lambda i: (0, 0, 0)),
            pl.BlockSpec((3, 1, C), lambda i: (0, 0, 0)),
        ],
        out_specs=pl.BlockSpec((1, 3, HW, C), lambda i: (i, 0, 0, 0)),
        compiler_params=_cp(("parallel",)),
    )(x2, gsel, gamma, beta, w_qkv, b_qkv)
    attn = flash_attention(qkv, scale=float(C) ** -0.5)
    out = matmul_bias(attn.reshape(N * HW, C), p["proj_out"]["w"].reshape(C, C),
                      p["proj_out"]["b"], residual=x2.reshape(N * HW, C))
    return out.reshape(N, H, W, C)


def encoder(x, ep, cfg):
    h = conv3x3_im2col(x, ep["conv_in"], stride=1, pad=((1, 1), (1, 1)))
    n_lvls = len(cfg["ch_mult"])
    for lvl in range(n_lvls):
        for blk in range(cfg["num_res_blocks"]):
            h = resnet_block(h, ep["down"][lvl]["block"][blk], cfg["groups"])
        if lvl != n_lvls - 1:
            h = conv3x3_im2col(h, ep["down"][lvl]["downsample"], stride=2,
                               pad=((0, 1), (0, 1)))
    h = resnet_block(h, ep["mid"]["block_1"], cfg["groups"])
    h = attn_block(h, ep["mid"]["attn_1"], cfg["groups"])
    h = resnet_block(h, ep["mid"]["block_2"], cfg["groups"])
    h = gn_conv3x3(h, ep["norm_out"], ep["conv_out"], cfg["groups"], swish=True)
    return h


def vq_socket_forward(x_nchw, params, cfg, discrete_level):
    x = jnp.transpose(x_nchw, (0, 2, 3, 1)).astype(jnp.bfloat16)   # NCHW -> NHWC
    h1 = encoder(x, params["encoder"], cfg)                        # bf16
    if discrete_level == 0:
        y = h1.astype(jnp.float32)
    elif discrete_level == 1:
        h2 = conv1x1(h1, params["quant_conv"])
        h2 = vector_quantize(h2, params["codebook"])
        y = jnp.concatenate([h1.astype(jnp.float32), h2], axis=-1)  # cat(dim=1)
    elif discrete_level == 2:
        h2 = conv1x1(h1, params["quant_conv"])
        y = vector_quantize(h2, params["codebook"])
    else:
        raise ValueError(
            f"discrete_level should be 0, 1 or 2, not {discrete_level}")
    return jnp.transpose(y, (0, 3, 1, 2))                           # NHWC -> NCHW


# ----------------------------------------------------------------------------
# Deterministic synthetic parameter init (shapes implied by VQModel config)
# ----------------------------------------------------------------------------

class KeyGen:
    def __init__(self, seed):
        self.key = jax.random.PRNGKey(seed)

    def __call__(self):
        self.key, sub = jax.random.split(self.key)
        return sub


def conv_params(key, kh, kw, cin, cout):
    k1, k2 = jax.random.split(key)
    fan = kh * kw * cin
    w = jax.random.normal(k1, (kh, kw, cin, cout), jnp.float32) / math.sqrt(fan)
    b = 0.01 * jax.random.normal(k2, (cout,), jnp.float32)
    return {"w": w, "b": b}


def norm_params(key, c):
    k1, k2 = jax.random.split(key)
    return {"gamma": 1.0 + 0.1 * jax.random.normal(k1, (c,), jnp.float32),
            "beta": 0.1 * jax.random.normal(k2, (c,), jnp.float32)}


def resblock_params(key, cin, cout):
    ks = jax.random.split(key, 5)
    p = {"norm1": norm_params(ks[0], cin),
         "conv1": conv_params(ks[1], 3, 3, cin, cout),
         "norm2": norm_params(ks[2], cout),
         "conv2": conv_params(ks[3], 3, 3, cout, cout)}
    if cin != cout:
        p["nin_shortcut"] = conv_params(ks[4], 1, 1, cin, cout)
    return p


def attn_params(key, c):
    ks = jax.random.split(key, 5)
    return {"norm": norm_params(ks[0], c),
            "q": conv_params(ks[1], 1, 1, c, c),
            "k": conv_params(ks[2], 1, 1, c, c),
            "v": conv_params(ks[3], 1, 1, c, c),
            "proj_out": conv_params(ks[4], 1, 1, c, c)}


def init_params(seed, cfg):
    kg = KeyGen(seed)
    ch, ch_mult = cfg["ch"], cfg["ch_mult"]
    enc = {"conv_in": conv_params(kg(), 3, 3, cfg["in_channels"], ch)}
    downs = []
    block_in = ch
    for lvl, mult in enumerate(ch_mult):
        block_out = ch * mult
        blocks = []
        for _ in range(cfg["num_res_blocks"]):
            blocks.append(resblock_params(kg(), block_in, block_out))
            block_in = block_out
        d = {"block": blocks}
        if lvl != len(ch_mult) - 1:
            d["downsample"] = conv_params(kg(), 3, 3, block_in, block_in)
        downs.append(d)
    enc["down"] = downs
    enc["mid"] = {"block_1": resblock_params(kg(), block_in, block_in),
                  "attn_1": attn_params(kg(), block_in),
                  "block_2": resblock_params(kg(), block_in, block_in)}
    enc["norm_out"] = norm_params(kg(), block_in)
    enc["conv_out"] = conv_params(kg(), 3, 3, block_in, cfg["z_channels"])
    params = {"encoder": enc,
              "quant_conv": conv_params(kg(), 1, 1, cfg["z_channels"],
                                        cfg["embed_dim"]),
              "codebook": jax.random.uniform(
                  kg(), (cfg["n_embed"], cfg["embed_dim"]), jnp.float32,
                  -1.0 / cfg["n_embed"], 1.0 / cfg["n_embed"])}
    return params


# ----------------------------------------------------------------------------
if __name__ == "__main__":
    # Synthetic VQparams (small, but structurally faithful to taming VQModel).
    # TODO(synk): taming uses GroupNorm(num_groups=32); reduced to 8 for the
    # small synthetic channel counts used here.
    cfg = {"in_channels": 3, "ch": 32, "ch_mult": (1, 2), "num_res_blocks": 1,
           "z_channels": 8, "embed_dim": 8, "n_embed": 64, "groups": 8,
           "resolution": 16}

    params = init_params(42, cfg)

    key = jax.random.PRNGKey(0)
    x = jax.random.normal(key, (2, 3, 16, 16), jnp.float32)   # NCHW like PyTorch

    y0 = jax.block_until_ready(vq_socket_forward(x, params, cfg, discrete_level=0))
    y1 = jax.block_until_ready(vq_socket_forward(x, params, cfg, discrete_level=1))
    y2 = jax.block_until_ready(vq_socket_forward(x, params, cfg, discrete_level=2))

    assert y0.shape == (2, cfg["z_channels"], 8, 8), y0.shape
    assert y1.shape == (2, cfg["z_channels"] + cfg["embed_dim"], 8, 8), y1.shape
    assert y2.shape == (2, cfg["embed_dim"], 8, 8), y2.shape
    assert bool(jnp.all(jnp.isfinite(y0))) and bool(jnp.all(jnp.isfinite(y1))) \
        and bool(jnp.all(jnp.isfinite(y2)))

    print("KERNEL_OK")
</pallas_src>

<mosaic_0001>
module attributes {stable_mosaic.version = 11 : i64} {
  func.func @_matmul_bias_kernel(%arg0: i32, %arg1: memref<512x27xbf16, #tpu.memory_space<vmem>>, %arg2: memref<27x32xbf16, #tpu.memory_space<vmem>>, %arg3: memref<1x32xf32, #tpu.memory_space<vmem>>, %arg4: memref<512x32xbf16, #tpu.memory_space<vmem>>) attributes {dimension_semantics = [#tpu.dimension_semantics<parallel>], iteration_bounds = array<i64: 1>, scalar_prefetch = 0 : i64, scratch_operands = 0 : i64, tpu.core_type = #tpu.core_type<tc>, window_params = [{transform_indices = @transform_0, window_bounds = array<i64: 512, 27>}, {pipeline_mode = #tpu.pipeline_mode<synchronous>, transform_indices = @transform_1, window_bounds = array<i64: 27, 32>}, {pipeline_mode = #tpu.pipeline_mode<synchronous>, transform_indices = @transform_2, window_bounds = array<i64: 1, 32>}, {transform_indices = @transform_3, window_bounds = array<i64: 512, 32>}]} {
    %c0 = arith.constant 0 : index
    %c0_0 = arith.constant 0 : index
    %0 = vector.load %arg1[%c0, %c0_0] : memref<512x27xbf16, #tpu.memory_space<vmem>>, vector<512x27xbf16>
    %c0_1 = arith.constant 0 : index
    %c0_2 = arith.constant 0 : index
    %1 = vector.load %arg2[%c0_1, %c0_2] : memref<27x32xbf16, #tpu.memory_space<vmem>>, vector<27x32xbf16>
    %cst = arith.constant dense<0.000000e+00> : vector<512x32xf32>
    %2 = tpu.matmul %0, %1, %cst {dimension_numbers = #tpu.dot_dimension_numbers<[1], [0], [0], [1], [0, 0, 1, 1], [], []>} : vector<512x27xbf16>, vector<27x32xbf16>, vector<512x32xf32> -> vector<512x32xf32>
    %c0_3 = arith.constant 0 : index
    %c0_4 = arith.constant 0 : index
    %3 = vector.load %arg3[%c0_3, %c0_4] : memref<1x32xf32, #tpu.memory_space<vmem>>, vector<1x32xf32>
    %4 = vector.broadcast %3 : vector<1x32xf32> to vector<512x32xf32>
    %5 = arith.addf %2, %4 : vector<512x32xf32>
    %6 = arith.truncf %5 : vector<512x32xf32> to vector<512x32xbf16>
    %c0_5 = arith.constant 0 : index
    %c0_6 = arith.constant 0 : index
    %7 = vector.load %arg4[%c0_5, %c0_6] : memref<512x32xbf16, #tpu.memory_space<vmem>>, vector<512x32xbf16>
    tpu.vector_store %arg4[%c0_5, %c0_6], %6 {strides = array<i32>} : memref<512x32xbf16, #tpu.memory_space<vmem>>, vector<512x32xbf16>,
    return
  }
  func.func @transform_0(%arg0: i32) -> (i32, i32) {
    %c0_i32 = arith.constant 0 : i32
    %c0_i32_0 = arith.constant 0 : i32
    return %arg0, %c0_i32 : i32, i32
  }
  func.func @transform_1(%arg0: i32) -> (i32, i32) {
    %c0_i32 = arith.constant 0 : i32
    %c0_i32_0 = arith.constant 0 : i32
    %c0_i32_1 = arith.constant 0 : i32
    return %c0_i32, %c0_i32_0 : i32, i32
  }
  func.func @transform_2(%arg0: i32) -> (i32, i32) {
    %c0_i32 = arith.constant 0 : i32
    %c0_i32_0 = arith.constant 0 : i32
    %c0_i32_1 = arith.constant 0 : i32
    return %c0_i32, %c0_i32_0 : i32, i32
  }
  func.func @transform_3(%arg0: i32) -> (i32, i32) {
    %c0_i32 = arith.constant 0 : i32
    %c0_i32_0 = arith.constant 0 : i32
    return %arg0, %c0_i32 : i32, i32
  }
}

</mosaic_0001>

<llo_original>
// kernel: tpu_custom_call.1
$region0: #{tpu_custom_call.1}
  #allocation0 [shape = 'u32[]', space=smem, size = 0x4, offset = 0x4, fixed_abs, tag = 'smem constant byte address 0x4 - core index']
  #allocation1 [shape = 'u32[144,128]{1,0:T(1,128)}', space=vmem, size = 0x12000, scoped, tag = 'internal scratch']
  %s0 = inlined_call_operand.vmem [shape: bf16[512,27], index: 0, kind: input, shape index: {}]
  %s1 = inlined_call_operand.vmem [shape: bf16[27,32], index: 1, kind: input, shape index: {}]
  %s2 = inlined_call_operand.vmem [shape: f32[1,32], index: 2, kind: input, shape index: {}]
  %s3 = inlined_call_operand.vmem [shape: bf16[512,32], index: 3, kind: output, shape index: {}]
  %s4 = sld [smem:[#allocation0]]
  $region22: #{tpu_custom_call.1} parent=0
    _
  %s6 = ssub.s32 1, %s4
  %s7 = scalar_select 0, %s6, %s4
  // Predicated region
  $region2: #{tpu_custom_call.1} parent=0 // pred_check
    _
  $region3: #{tpu_custom_call.1} parent=0 // pred_check_branch
    %9 = sbr.rel (0) target = $region5
  $region4: #{tpu_custom_call.1} parent=0 // pred_region
    _
  $region5: #{tpu_custom_call.1} parent=0 // pred_fallthru
    _
  // Predicated region
  $region6: #{tpu_custom_call.1} parent=0 // pred_check
    _
  $region7: #{tpu_custom_call.1} parent=0 // pred_check_branch
    %11 = sbr.rel (0) target = $region9
  $region8: #{tpu_custom_call.1} parent=0 // pred_region
    _
  $region9: #{tpu_custom_call.1} parent=0 // pred_fallthru
    _
  // Predicated region
  $region10: #{tpu_custom_call.1} parent=0 // pred_check
    _
  $region11: #{tpu_custom_call.1} parent=0 // pred_check_branch
    %13 = sbr.rel (0) target = $region13
  $region12: #{tpu_custom_call.1} parent=0 // pred_region
    _
  $region13: #{tpu_custom_call.1} parent=0 // pred_fallthru
    _
  %v15 = vld [vmem:[%s0] sm:$0xf]
  %v16 = vld [vmem:[%s0 + $0x4] sm:$0xf]
  %v17 = vld [vmem:[%s0 + $0x8] sm:$0xf]
  %v18 = vld [vmem:[%s0 + $0xc] sm:$0xf]
  %v19 = vld [vmem:[%s0 + $0x10] sm:$0xf]
  %v20 = vld [vmem:[%s0 + $0x14] sm:$0xf]
  %v21 = vld [vmem:[%s0 + $0x18] sm:$0xf]
  %v22 = vld [vmem:[%s0 + $0x1c] sm:$0xf]
  %v23 = vld [vmem:[%s0 + $0x20] sm:$0xf]
  %v24 = vld [vmem:[%s0 + $0x24] sm:$0xf]
  %v25 = vld [vmem:[%s0 + $0x28] sm:$0xf]
  %v26 = vld [vmem:[%s0 + $0x2c] sm:$0xf]
  %v27 = vld [vmem:[%s0 + $0x30] sm:$0xf]
  %v28 = vld [vmem:[%s0 + $0x34] sm:$0xf]
  %v29 = vld [vmem:[%s0 + $0x38] sm:$0xf]
  %v30 = vld [vmem:[%s0 + $0x3c] sm:$0xf]
  %v31 = vld [vmem:[%s0 + $0x40] sm:$0xf]
  %v32 = vld [vmem:[%s0 + $0x44] sm:$0xf]
  %v33 = vld [vmem:[%s0 + $0x48] sm:$0xf]
  %v34 = vld [vmem:[%s0 + $0x4c] sm:$0xf]
  %v35 = vld [vmem:[%s0 + $0x50] sm:$0xf]
  %v36 = vld [vmem:[%s0 + $0x54] sm:$0xf]
  %v37 = vld [vmem:[%s0 + $0x58] sm:$0xf]
  %v38 = vld [vmem:[%s0 + $0x5c] sm:$0xf]
  %v39 = vld [vmem:[%s0 + $0x60] sm:$0xf]
  %v40 = vld [vmem:[%s0 + $0x64] sm:$0xf]
  %v41 = vld [vmem:[%s0 + $0x68] sm:$0xf]
  %v42 = vld [vmem:[%s0 + $0x6c] sm:$0xf]
  %v43 = vld [vmem:[%s0 + $0x70] sm:$0xf]
  %v44 = vld [vmem:[%s0 + $0x74] sm:$0xf]
  %v45 = vld [vmem:[%s0 + $0x78] sm:$0xf]
  %v46 = vld [vmem:[%s0 + $0x7c] sm:$0xf]
  %v47 = vld [vmem:[%s0 + $0x80] sm:$0xf]
  %v48 = vld [vmem:[%s0 + $0x84] sm:$0xf]
  %v49 = vld [vmem:[%s0 + $0x88] sm:$0xf]
  %v50 = vld [vmem:[%s0 + $0x8c] sm:$0xf]
  %v51 = vld [vmem:[%s0 + $0x90] sm:$0xf]
  %v52 = vld [vmem:[%s0 + $0x94] sm:$0xf]
  %v53 = vld [vmem:[%s0 + $0x98] sm:$0xf]
  %v54 = vld [vmem:[%s0 + $0x9c] sm:$0xf]
  %v55 = vld [vmem:[%s0 + $0xa0] sm:$0xf]
  %v56 = vld [vmem:[%s0 + $0xa4] sm:$0xf]
  %v57 = vld [vmem:[%s0 + $0xa8] sm:$0xf]
  %v58 = vld [vmem:[%s0 + $0xac] sm:$0xf]
  %v59 = vld [vmem:[%s0 + $0xb0] sm:$0xf]
  %v60 = vld [vmem:[%s0 + $0xb4] sm:$0xf]
  %v61 = vld [vmem:[%s0 + $0xb8] sm:$0xf]
  %v62 = vld [vmem:[%s0 + $0xbc] sm:$0xf]
  %v63 = vld [vmem:[%s0 + $0xc0] sm:$0xf]
  %v64 = vld [vmem:[%s0 + $0xc4] sm:$0xf]
  %v65 = vld [vmem:[%s0 + $0xc8] sm:$0xf]
  %v66 = vld [vmem:[%s0 + $0xcc] sm:$0xf]
  %v67 = vld [vmem:[%s0 + $0xd0] sm:$0xf]
  %v68 = vld [vmem:[%s0 + $0xd4] sm:$0xf]
  %v69 = vld [vmem:[%s0 + $0xd8] sm:$0xf]
  %v70 = vld [vmem:[%s0 + $0xdc] sm:$0xf]
  %v71 = vld [vmem:[%s0 + $0xe0] sm:$0xf]
  %v72 = vld [vmem:[%s0 + $0xe4] sm:$0xf]
  %v73 = vld [vmem:[%s0 + $0xe8] sm:$0xf]
  %v74 = vld [vmem:[%s0 + $0xec] sm:$0xf]
  %v75 = vld [vmem:[%s0 + $0xf0] sm:$0xf]
  %v76 = vld [vmem:[%s0 + $0xf4] sm:$0xf]
  %v77 = vld [vmem:[%s0 + $0xf8] sm:$0xf]
  %v78 = vld [vmem:[%s0 + $0xfc] sm:$0xf]
  %v79 = vld [vmem:[%s1] sm:$0xf]
  %v80 = vld [vmem:[%s1 + $0x4] sm:$0xf]
  %v81 = vld [vmem:[%s1 + $0x8] sm:$0xf]
  %v82 = vld [vmem:[%s1 + $0xc] sm:$0x3]
  %v83 = vld [vmem:[%s2] sm:$0x1]
  %v85 = vlaneseq
  %v86 = vshrl.u32 %v85, 7
  %v87 = vsub.s32 0, %v86
  %v88 = vrot.slane %v83, %v87
  %v154 = vunpack.c.l.b16 %v15
  %v155 = vunpack.c.l.b16 %v16
  %v156 = vunpack.c.l.b16 %v17
  %v157 = vunpack.c.l.b16 %v18
  %v158 = vunpack.c.l.b16 %v19
  %v159 = vunpack.c.l.b16 %v20
  %v160 = vunpack.c.l.b16 %v21
  %v161 = vunpack.c.l.b16 %v22
  %v162 = vunpack.c.l.b16 %v23
  %v163 = vunpack.c.l.b16 %v24
  %v164 = vunpack.c.l.b16 %v25
  %v165 = vunpack.c.l.b16 %v26
  %v166 = vunpack.c.l.b16 %v27
  %v167 = vunpack.c.l.b16 %v28
  %v168 = vunpack.c.l.b16 %v29
  %v169 = vunpack.c.l.b16 %v30
  %v170 = vunpack.c.l.b16 %v31
  %v171 = vunpack.c.l.b16 %v32
  %v172 = vunpack.c.l.b16 %v33
  %v173 = vunpack.c.l.b16 %v34
  %v174 = vunpack.c.l.b16 %v35
  %v175 = vunpack.c.l.b16 %v36
  %v176 = vunpack.c.l.b16 %v37
  %v177 = vunpack.c.l.b16 %v38
  %v178 = vunpack.c.l.b16 %v39
  %v179 = vunpack.c.l.b16 %v40
  %v180 = vunpack.c.l.b16 %v41
  %v181 = vunpack.c.l.b16 %v42
  %v182 = vunpack.c.l.b16 %v43
  %v183 = vunpack.c.l.b16 %v44
  %v184 = vunpack.c.l.b16 %v45
  %v185 = vunpack.c.l.b16 %v46
  %v186 = vunpack.c.l.b16 %v47
  %v187 = vunpack.c.l.b16 %v48
  %v188 = vunpack.c.l.b16 %v49
  %v189 = vunpack.c.l.b16 %v50
  %v190 = vunpack.c.l.b16 %v51
  %v191 = vunpack.c.l.b16 %v52
  %v192 = vunpack.c.l.b16 %v53
  %v193 = vunpack.c.l.b16 %v54
  %v194 = vunpack.c.l.b16 %v55
  %v195 = vunpack.c.l.b16 %v56
  %v196 = vunpack.c.l.b16 %v57
  %v197 = vunpack.c.l.b16 %v58
  %v198 = vunpack.c.l.b16 %v59
  %v199 = vunpack.c.l.b16 %v60
  %v200 = vunpack.c.l.b16 %v61
  %v201 = vunpack.c.l.b16 %v62
  %v202 = vunpack.c.l.b16 %v63
  %v203 = vunpack.c.l.b16 %v64
  %v204 = vunpack.c.l.b16 %v65
  %v205 = vunpack.c.l.b16 %v66
  %v206 = vunpack.c.l.b16 %v67
  %v207 = vunpack.c.l.b16 %v68
  %v208 = vunpack.c.l.b16 %v69
  %v209 = vunpack.c.l.b16 %v70
  %v210 = vunpack.c.l.b16 %v71
  %v211 = vunpack.c.l.b16 %v72
  %v212 = vunpack.c.l.b16 %v73
  %v213 = vunpack.c.l.b16 %v74
  %v214 = vunpack.c.l.b16 %v75
  %v215 = vunpack.c.l.b16 %v76
  %v216 = vunpack.c.l.b16 %v77
  %v217 = vunpack.c.l.b16 %v78
  %v218 = vpack.c.b16 %v155, %v154
  %v219 = vpack.c.b16 %v157, %v156
  %v220 = vpack.c.b16 %v159, %v158
  %v221 = vpack.c.b16 %v161, %v160
  %v222 = vpack.c.b16 %v163, %v162
  %v223 = vpack.c.b16 %v165, %v164
  %v224 = vpack.c.b16 %v167, %v166
  %v225 = vpack.c.b16 %v169, %v168
  %v226 = vpack.c.b16 %v171, %v170
  %v227 = vpack.c.b16 %v173, %v172
  %v228 = vpack.c.b16 %v175, %v174
  %v229 = vpack.c.b16 %v177, %v176
  %v230 = vpack.c.b16 %v179, %v178
  %v231 = vpack.c.b16 %v181, %v180
  %v232 = vpack.c.b16 %v183, %v182
  %v233 = vpack.c.b16 %v185, %v184
  %v234 = vpack.c.b16 %v187, %v186
  %v235 = vpack.c.b16 %v189, %v188
  %v236 = vpack.c.b16 %v191, %v190
  %v237 = vpack.c.b16 %v193, %v192
  %v238 = vpack.c.b16 %v195, %v194
  %v239 = vpack.c.b16 %v197, %v196
  %v240 = vpack.c.b16 %v199, %v198
  %v241 = vpack.c.b16 %v201, %v200
  %v242 = vpack.c.b16 %v203, %v202
  %v243 = vpack.c.b16 %v205, %v204
  %v244 = vpack.c.b16 %v207, %v206
  %v245 = vpack.c.b16 %v209, %v208
  %v246 = vpack.c.b16 %v211, %v210
  %v247 = vpack.c.b16 %v213, %v212
  %v248 = vpack.c.b16 %v215, %v214
  %v249 = vpack.c.b16 %v217, %v216
  %v254 = vunpack.c.l.b16 %v79
  %v255 = vunpack.c.l.b16 %v80
  %v256 = vunpack.c.l.b16 %v81
  %v257 = vunpack.c.l.b16 %v82
  %v258 = vpack.c.b16 %v255, %v254
  %v259 = vpack.c.b16 %v257, %v256
  %vm261 = vcmask 220160
  %v263 = vsel %vm261, %v218, 0
  %v266 = vsel %vm261, %v219, 0
  %v269 = vsel %vm261, %v220, 0
  %v272 = vsel %vm261, %v221, 0
  %v275 = vsel %vm261, %v222, 0
  %v278 = vsel %vm261, %v223, 0
  %v281 = vsel %vm261, %v224, 0
  %v284 = vsel %vm261, %v225, 0
  %v287 = vsel %vm261, %v226, 0
  %v290 = vsel %vm261, %v227, 0
  %v293 = vsel %vm261, %v228, 0
  %v296 = vsel %vm261, %v229, 0
  %v299 = vsel %vm261, %v230, 0
  %v302 = vsel %vm261, %v231, 0
  %v305 = vsel %vm261, %v232, 0
  %v308 = vsel %vm261, %v233, 0
  %v311 = vsel %vm261, %v234, 0
  %v314 = vsel %vm261, %v235, 0
  %v317 = vsel %vm261, %v236, 0
  %v320 = vsel %vm261, %v237, 0
  %v323 = vsel %vm261, %v238, 0
  %v326 = vsel %vm261, %v239, 0
  %v329 = vsel %vm261, %v240, 0
  %v332 = vsel %vm261, %v241, 0
  %v335 = vsel %vm261, %v242, 0
  %v338 = vsel %vm261, %v243, 0
  %v341 = vsel %vm261, %v244, 0
  %v344 = vsel %vm261, %v245, 0
  %v347 = vsel %vm261, %v246, 0
  %v350 = vsel %vm261, %v247, 0
  %v353 = vsel %vm261, %v248, 0
  %v356 = vsel %vm261, %v249, 0
  %vm358 = vcmask 1044480
  %vm359 = vcmask 1045504
  %v360 = vsel %vm358, 4294967295, 65535
  %v361 = vsel %vm359, %v360, 0
  %v363 = vand.u32 %v259, %v361
  %365 = vmatprep.subr.bf16.mxu0 0
  %366 = vmatpush1.bf16.msra.mxu0 0
  %367 = vmatprep.subr.bf16.mxu0 0
  %368 = vmatpush1.bf16.msra.mxu0 0
  %369 = vmatprep.subr.bf16.mxu0 0
  %370 = vmatpush1.bf16.msra.mxu0 0
  %371 = vmatprep.subr.bf16.mxu0 0
  %372 = vmatpush1.bf16.msra.mxu0 0
  %373 = vmatprep.subr.bf16.mxu0 0
  %374 = vmatpush1.bf16.msra.mxu0 0
  %375 = vmatprep.subr.bf16.mxu0 0
  %376 = vmatpush1.bf16.msra.mxu0 0
  %377 = vmatprep.subr.bf16.mxu0 0
  %378 = vmatpush1.bf16.msra.mxu0 %v363
  %379 = vmatprep.subr.bf16.mxu0 0
  %380 = vmatpush1.bf16.msra.mxu0 %v258
  %381 = vmatprep.subr.bf16.mxu0 0
  %382 = vmatpush2.bf16.msra.mxu0 0
  %383 = vmatprep.subr.bf16.mxu0 0
  %384 = vmatpush2.bf16.msra.mxu0 0
  %385 = vmatprep.subr.bf16.mxu0 0
  %386 = vmatpush2.bf16.msra.mxu0 0
  %387 = vmatprep.subr.bf16.mxu0 0
  %388 = vmatpush2.bf16.msra.mxu0 0
  %389 = vmatprep.subr.bf16.mxu0 0
  %390 = vmatpush2.bf16.msra.mxu0 0
  %391 = vmatprep.subr.bf16.mxu0 0
  %392 = vmatpush2.bf16.msra.mxu0 0
  %393 = vmatprep.subr.bf16.mxu0 0
  %394 = vmatpush2.bf16.msra.mxu0 0
  %395 = vmatprep.subr.bf16.mxu0 0
  %396 = vmatpush2.bf16.msra.mxu0 0
  %397 = vmatprep.mubr.bf16.mxu0 0
  %398 = vmatmul.mubr.bf16.gmra.mxu0 %v263
  %v399 = vpop.f32.mrf.mxu0
  %v400 = vadd.f32 %v88, %v399
  %v401 = vpop.f32.mrf.mxu0
  %v402 = vpop.f32.mrf.mxu0
  %v403 = vadd.f32 %v88, %v402
  %v404 = vpop.f32.mrf.mxu0
  %405 = vmatprep.mubr.bf16.mxu0 0
  %406 = vmatmul.mubr.bf16.gmra.mxu0 %v266
  %v407 = vpop.f32.mrf.mxu0
  %v408 = vadd.f32 %v88, %v407
  %v409 = vpop.f32.mrf.mxu0
  %v410 = vpop.f32.mrf.mxu0
  %v411 = vadd.f32 %v88, %v410
  %v412 = vpop.f32.mrf.mxu0
  %413 = vmatprep.mubr.bf16.mxu0 0
  %414 = vmatmul.mubr.bf16.gmra.mxu0 %v269
  %v415 = vpop.f32.mrf.mxu0
  %v416 = vadd.f32 %v88, %v415
  %v417 = vpop.f32.mrf.mxu0
  %v418 = vpop.f32.mrf.mxu0
  %v419 = vadd.f32 %v88, %v418
  %v420 = vpop.f32.mrf.mxu0
  %421 = vmatprep.mubr.bf16.mxu0 0
  %422 = vmatmul.mubr.bf16.gmra.mxu0 %v272
  %v423 = vpop.f32.mrf.mxu0
  %v424 = vadd.f32 %v88, %v423
  %v425 = vpop.f32.mrf.mxu0
  %v426 = vpop.f32.mrf.mxu0
  %v427 = vadd.f32 %v88, %v426
  %v428 = vpop.f32.mrf.mxu0
  %429 = vmatprep.mubr.bf16.mxu0 0
  %430 = vmatmul.mubr.bf16.gmra.mxu0 %v275
  %v431 = vpop.f32.mrf.mxu0
  %v432 = vadd.f32 %v88, %v431
  %v433 = vpop.f32.mrf.mxu0
  %v434 = vpop.f32.mrf.mxu0
  %v435 = vadd.f32 %v88, %v434
  %v436 = vpop.f32.mrf.mxu0
  %437 = vmatprep.mubr.bf16.mxu0 0
  %438 = vmatmul.mubr.bf16.gmra.mxu0 %v278
  %v439 = vpop.f32.mrf.mxu0
  %v440 = vadd.f32 %v88, %v439
  %v441 = vpop.f32.mrf.mxu0
  %v442 = vpop.f32.mrf.mxu0
  %v443 = vadd.f32 %v88, %v442
  %v444 = vpop.f32.mrf.mxu0
  %445 = vmatprep.mubr.bf16.mxu0 0
  %446 = vmatmul.mubr.bf16.gmra.mxu0 %v281
  %v447 = vpop.f32.mrf.mxu0
  %v448 = vadd.f32 %v88, %v447
  %v449 = vpop.f32.mrf.mxu0
  %v450 = vpop.f32.mrf.mxu0
  %v451 = vadd.f32 %v88, %v450
  %v452 = vpop.f32.mrf.mxu0
  %453 = vmatprep.mubr.bf16.mxu0 0
  %454 = vmatmul.mubr.bf16.gmra.mxu0 %v284
  %v455 = vpop.f32.mrf.mxu0
  %v456 = vadd.f32 %v88, %v455
  %v457 = vpop.f32.mrf.mxu0
  %v458 = vpop.f32.mrf.mxu0
  %v459 = vadd.f32 %v88, %v458
  %v460 = vpop.f32.mrf.mxu0
  %461 = vmatprep.mubr.bf16.mxu0 0
  %462 = vmatmul.mubr.bf16.gmra.mxu0 %v287
  %v463 = vpop.f32.mrf.mxu0
  %v464 = vadd.f32 %v88, %v463
  %v465 = vpop.f32.mrf.mxu0
  %v466 = vpop.f32.mrf.mxu0
  %v467 = vadd.f32 %v88, %v466
  %v468 = vpop.f32.mrf.mxu0
  %469 = vmatprep.mubr.bf16.mxu0 0
  %470 = vmatmul.mubr.bf16.gmra.mxu0 %v290
  %v471 = vpop.f32.mrf.mxu0
  %v472 = vadd.f32 %v88, %v471
  %v473 = vpop.f32.mrf.mxu0
  %v474 = vpop.f32.mrf.mxu0
  %v475 = vadd.f32 %v88, %v474
  %v476 = vpop.f32.mrf.mxu0
  %477 = vmatprep.mubr.bf16.mxu0 0
  %478 = vmatmul.mubr.bf16.gmra.mxu0 %v293
  %v479 = vpop.f32.mrf.mxu0
  %v480 = vadd.f32 %v88, %v479
  %v481 = vpop.f32.mrf.mxu0
  %v482 = vpop.f32.mrf.mxu0
  %v483 = vadd.f32 %v88, %v482
  %v484 = vpop.f32.mrf.mxu0
  %485 = vmatprep.mubr.bf16.mxu0 0
  %486 = vmatmul.mubr.bf16.gmra.mxu0 %v296
  %v487 = vpop.f32.mrf.mxu0
  %v488 = vadd.f32 %v88, %v487
  %v489 = vpop.f32.mrf.mxu0
  %v490 = vpop.f32.mrf.mxu0
  %v491 = vadd.f32 %v88, %v490
  %v492 = vpop.f32.mrf.mxu0
  %493 = vmatprep.mubr.bf16.mxu0 0
  %494 = vmatmul.mubr.bf16.gmra.mxu0 %v299
  %v495 = vpop.f32.mrf.mxu0
  %v496 = vadd.f32 %v88, %v495
  %v497 = vpop.f32.mrf.mxu0
  %v498 = vpop.f32.mrf.mxu0
  %v499 = vadd.f32 %v88, %v498
  %v500 = vpop.f32.mrf.mxu0
  %501 = vmatprep.mubr.bf16.mxu0 0
  %502 = vmatmul.mubr.bf16.gmra.mxu0 %v302
  %v503 = vpop.f32.mrf.mxu0
  %v504 = vadd.f32 %v88, %v503
  %v505 = vpop.f32.mrf.mxu0
  %v506 = vpop.f32.mrf.mxu0
  %v507 = vadd.f32 %v88, %v506
  %v508 = vpop.f32.mrf.mxu0
  %509 = vmatprep.mubr.bf16.mxu0 0
  %510 = vmatmul.mubr.bf16.gmra.mxu0 %v305
  %v511 = vpop.f32.mrf.mxu0
  %v512 = vadd.f32 %v88, %v511
  %v513 = vpop.f32.mrf.mxu0
  %v514 = vpop.f32.mrf.mxu0
  %v515 = vadd.f32 %v88, %v514
  %v516 = vpop.f32.mrf.mxu0
  %517 = vmatprep.mubr.bf16.mxu0 0
  %518 = vmatmul.mubr.bf16.gmra.mxu0 %v308
  %v519 = vpop.f32.mrf.mxu0
  %v520 = vadd.f32 %v88, %v519
  %v521 = vpop.f32.mrf.mxu0
  %v522 = vpop.f32.mrf.mxu0
  %v523 = vadd.f32 %v88, %v522
  %v524 = vpop.f32.mrf.mxu0
  %525 = vmatprep.mubr.bf16.mxu0 0
  %526 = vmatmul.mubr.bf16.gmra.mxu0 %v311
  %v527 = vpop.f32.mrf.mxu0
  %v528 = vadd.f32 %v88, %v527
  %v529 = vpop.f32.mrf.mxu0
  %v530 = vpop.f32.mrf.mxu0
  %v531 = vadd.f32 %v88, %v530
  %v532 = vpop.f32.mrf.mxu0
  %533 = vmatprep.mubr.bf16.mxu0 0
  %534 = vmatmul.mubr.bf16.gmra.mxu0 %v314
  %v535 = vpop.f32.mrf.mxu0
  %v536 = vadd.f32 %v88, %v535
  %v537 = vpop.f32.mrf.mxu0
  %v538 = vpop.f32.mrf.mxu0
  %v539 = vadd.f32 %v88, %v538
  %v540 = vpop.f32.mrf.mxu0
  %541 = vmatprep.mubr.bf16.mxu0 0
  %542 = vmatmul.mubr.bf16.gmra.mxu0 %v317
  %v543 = vpop.f32.mrf.mxu0
  %v544 = vadd.f32 %v88, %v543
  %v545 = vpop.f32.mrf.mxu0
  %v546 = vpop.f32.mrf.mxu0
  %v547 = vadd.f32 %v88, %v546
  %v548 = vpop.f32.mrf.mxu0
  %549 = vmatprep.mubr.bf16.mxu0 0
  %550 = vmatmul.mubr.bf16.gmra.mxu0 %v320
  %v551 = vpop.f32.mrf.mxu0
  %v552 = vadd.f32 %v88, %v551
  %v553 = vpop.f32.mrf.mxu0
  %v554 = vpop.f32.mrf.mxu0
  %v555 = vadd.f32 %v88, %v554
  %v556 = vpop.f32.mrf.mxu0
  %557 = vmatprep.mubr.bf16.mxu0 0
  %558 = vmatmul.mubr.bf16.gmra.mxu0 %v323
  %v559 = vpop.f32.mrf.mxu0
  %v560 = vadd.f32 %v88, %v559
  %v561 = vpop.f32.mrf.mxu0
  %v562 = vpop.f32.mrf.mxu0
  %v563 = vadd.f32 %v88, %v562
  %v564 = vpop.f32.mrf.mxu0
  %565 = vmatprep.mubr.bf16.mxu0 0
  %566 = vmatmul.mubr.bf16.gmra.mxu0 %v326
  %v567 = vpop.f32.mrf.mxu0
  %v568 = vadd.f32 %v88, %v567
  %v569 = vpop.f32.mrf.mxu0
  %v570 = vpop.f32.mrf.mxu0
  %v571 = vadd.f32 %v88, %v570
  %v572 = vpop.f32.mrf.mxu0
  %573 = vmatprep.mubr.bf16.mxu0 0
  %574 = vmatmul.mubr.bf16.gmra.mxu0 %v329
  %v575 = vpop.f32.mrf.mxu0
  %v576 = vadd.f32 %v88, %v575
  %v577 = vpop.f32.mrf.mxu0
  %v578 = vpop.f32.mrf.mxu0
  %v579 = vadd.f32 %v88, %v578
  %v580 = vpop.f32.mrf.mxu0
  %581 = vmatprep.mubr.bf16.mxu0 0
  %582 = vmatmul.mubr.bf16.gmra.mxu0 %v332
  %v583 = vpop.f32.mrf.mxu0
  %v584 = vadd.f32 %v88, %v583
  %v585 = vpop.f32.mrf.mxu0
  %v586 = vpop.f32.mrf.mxu0
  %v587 = vadd.f32 %v88, %v586
  %v588 = vpop.f32.mrf.mxu0
  %589 = vmatprep.mubr.bf16.mxu0 0
  %590 = vmatmul.mubr.bf16.gmra.mxu0 %v335
  %v591 = vpop.f32.mrf.mxu0
  %v592 = vadd.f32 %v88, %v591
  %v593 = vpop.f32.mrf.mxu0
  %v594 = vpop.f32.mrf.mxu0
  %v595 = vadd.f32 %v88, %v594
  %v596 = vpop.f32.mrf.mxu0
  %597 = vmatprep.mubr.bf16.mxu0 0
  %598 = vmatmul.mubr.bf16.gmra.mxu0 %v338
  %v599 = vpop.f32.mrf.mxu0
  %v600 = vadd.f32 %v88, %v599
  %v601 = vpop.f32.mrf.mxu0
  %v602 = vpop.f32.mrf.mxu0
  %v603 = vadd.f32 %v88, %v602
  %v604 = vpop.f32.mrf.mxu0
  %605 = vmatprep.mubr.bf16.mxu0 0
  %606 = vmatmul.mubr.bf16.gmra.mxu0 %v341
  %v607 = vpop.f32.mrf.mxu0
  %v608 = vadd.f32 %v88, %v607
  %v609 = vpop.f32.mrf.mxu0
  %v610 = vpop.f32.mrf.mxu0
  %v611 = vadd.f32 %v88, %v610
  %v612 = vpop.f32.mrf.mxu0
  %613 = vmatprep.mubr.bf16.mxu0 0
  %614 = vmatmul.mubr.bf16.gmra.mxu0 %v344
  %v615 = vpop.f32.mrf.mxu0
  %v616 = vadd.f32 %v88, %v615
  %v617 = vpop.f32.mrf.mxu0
  %v618 = vpop.f32.mrf.mxu0
  %v619 = vadd.f32 %v88, %v618
  %v620 = vpop.f32.mrf.mxu0
  %621 = vmatprep.mubr.bf16.mxu0 0
  %622 = vmatmul.mubr.bf16.gmra.mxu0 %v347
  %v623 = vpop.f32.mrf.mxu0
  %v624 = vadd.f32 %v88, %v623
  %v625 = vpop.f32.mrf.mxu0
  %v626 = vpop.f32.mrf.mxu0
  %v627 = vadd.f32 %v88, %v626
  %v628 = vpop.f32.mrf.mxu0
  %629 = vmatprep.mubr.bf16.mxu0 0
  %630 = vmatmul.mubr.bf16.gmra.mxu0 %v350
  %v631 = vpop.f32.mrf.mxu0
  %v632 = vadd.f32 %v88, %v631
  %v633 = vpop.f32.mrf.mxu0
  %v634 = vpop.f32.mrf.mxu0
  %v635 = vadd.f32 %v88, %v634
  %v636 = vpop.f32.mrf.mxu0
  %637 = vmatprep.mubr.bf16.mxu0 0
  %638 = vmatmul.mubr.bf16.gmra.mxu0 %v353
  %v639 = vpop.f32.mrf.mxu0
  %v640 = vadd.f32 %v88, %v639
  %v641 = vpop.f32.mrf.mxu0
  %v642 = vpop.f32.mrf.mxu0
  %v643 = vadd.f32 %v88, %v642
  %v644 = vpop.f32.mrf.mxu0
  %645 = vmatprep.mubr.bf16.mxu0 0
  %646 = vmatmul.mubr.bf16.gmra.mxu0 %v356
  %v647 = vpop.f32.mrf.mxu0
  %v648 = vadd.f32 %v88, %v647
  %v649 = vpop.f32.mrf.mxu0
  %v650 = vpop.f32.mrf.mxu0
  %v651 = vadd.f32 %v88, %v650
  %v652 = vpop.f32.mrf.mxu0
  %653 = vdwg.mxu0
  %v654 = vpack.c.bf16 %v403, %v400
  %v655 = vpack.c.bf16 %v411, %v408
  %v656 = vpack.c.bf16 %v419, %v416
  %v657 = vpack.c.bf16 %v427, %v424
  %v658 = vpack.c.bf16 %v435, %v432
  %v659 = vpack.c.bf16 %v443, %v440
  %v660 = vpack.c.bf16 %v451, %v448
  %v661 = vpack.c.bf16 %v459, %v456
  %v662 = vpack.c.bf16 %v467, %v464
  %v663 = vpack.c.bf16 %v475, %v472
  %v664 = vpack.c.bf16 %v483, %v480
  %v665 = vpack.c.bf16 %v491, %v488
  %v666 = vpack.c.bf16 %v499, %v496
  %v667 = vpack.c.bf16 %v507, %v504
  %v668 = vpack.c.bf16 %v515, %v512
  %v669 = vpack.c.bf16 %v523, %v520
  %v670 = vpack.c.bf16 %v531, %v528
  %v671 = vpack.c.bf16 %v539, %v536
  %v672 = vpack.c.bf16 %v547, %v544
  %v673 = vpack.c.bf16 %v555, %v552
  %v674 = vpack.c.bf16 %v563, %v560
  %v675 = vpack.c.bf16 %v571, %v568
  %v676 = vpack.c.bf16 %v579, %v576
  %v677 = vpack.c.bf16 %v587, %v584
  %v678 = vpack.c.bf16 %v595, %v592
  %v679 = vpack.c.bf16 %v603, %v600
  %v680 = vpack.c.bf16 %v611, %v608
  %v681 = vpack.c.bf16 %v619, %v616
  %v682 = vpack.c.bf16 %v627, %v624
  %v683 = vpack.c.bf16 %v635, %v632
  %v684 = vpack.c.bf16 %v643, %v640
  %v685 = vpack.c.bf16 %v651, %v648
  %v718 = vunpack.c.l.b16 %v654
  %v719 = vunpack.c.h.b16 %v654
  %v720 = vunpack.c.l.b16 %v655
  %v721 = vunpack.c.h.b16 %v655
  %v722 = vunpack.c.l.b16 %v656
  %v723 = vunpack.c.h.b16 %v656
  %v724 = vunpack.c.l.b16 %v657
  %v725 = vunpack.c.h.b16 %v657
  %v726 = vunpack.c.l.b16 %v658
  %v727 = vunpack.c.h.b16 %v658
  %v728 = vunpack.c.l.b16 %v659
  %v729 = vunpack.c.h.b16 %v659
  %v730 = vunpack.c.l.b16 %v660
  %v731 = vunpack.c.h.b16 %v660
  %v732 = vunpack.c.l.b16 %v661
  %v733 = vunpack.c.h.b16 %v661
  %v734 = vunpack.c.l.b16 %v662
  %v735 = vunpack.c.h.b16 %v662
  %v736 = vunpack.c.l.b16 %v663
  %v737 = vunpack.c.h.b16 %v663
  %v738 = vunpack.c.l.b16 %v664
  %v739 = vunpack.c.h.b16 %v664
  %v740 = vunpack.c.l.b16 %v665
  %v741 = vunpack.c.h.b16 %v665
  %v742 = vunpack.c.l.b16 %v666
  %v743 = vunpack.c.h.b16 %v666
  %v744 = vunpack.c.l.b16 %v667
  %v745 = vunpack.c.h.b16 %v667
  %v746 = vunpack.c.l.b16 %v668
  %v747 = vunpack.c.h.b16 %v668
  %v748 = vunpack.c.l.b16 %v669
  %v749 = vunpack.c.h.b16 %v669
  %v750 = vunpack.c.l.b16 %v670
  %v751 = vunpack.c.h.b16 %v670
  %v752 = vunpack.c.l.b16 %v671
  %v753 = vunpack.c.h.b16 %v671
  %v754 = vunpack.c.l.b16 %v672
  %v755 = vunpack.c.h.b16 %v672
  %v756 = vunpack.c.l.b16 %v673
  %v757 = vunpack.c.h.b16 %v673
  %v758 = vunpack.c.l.b16 %v674
  %v759 = vunpack.c.h.b16 %v674
  %v760 = vunpack.c.l.b16 %v675
  %v761 = vunpack.c.h.b16 %v675
  %v762 = vunpack.c.l.b16 %v676
  %v763 = vunpack.c.h.b16 %v676
  %v764 = vunpack.c.l.b16 %v677
  %v765 = vunpack.c.h.b16 %v677
  %v766 = vunpack.c.l.b16 %v678
  %v767 = vunpack.c.h.b16 %v678
  %v768 = vunpack.c.l.b16 %v679
  %v769 = vunpack.c.h.b16 %v679
  %v770 = vunpack.c.l.b16 %v680
  %v771 = vunpack.c.h.b16 %v680
  %v772 = vunpack.c.l.b16 %v681
  %v773 = vunpack.c.h.b16 %v681
  %v774 = vunpack.c.l.b16 %v682
  %v775 = vunpack.c.h.b16 %v682
  %v776 = vunpack.c.l.b16 %v683
  %v777 = vunpack.c.h.b16 %v683
  %v778 = vunpack.c.l.b16 %v684
  %v779 = vunpack.c.h.b16 %v684
  %v780 = vunpack.c.l.b16 %v685
  %v781 = vunpack.c.h.b16 %v685
  %v782 = vpack.c.b16 %v718, %v718
  %v783 = vpack.c.b16 %v719, %v719
  %v784 = vpack.c.b16 %v720, %v720
  %v785 = vpack.c.b16 %v721, %v721
  %v786 = vpack.c.b16 %v722, %v722
  %v787 = vpack.c.b16 %v723, %v723
  %v788 = vpack.c.b16 %v724, %v724
  %v789 = vpack.c.b16 %v725, %v725
  %v790 = vpack.c.b16 %v726, %v726
  %v791 = vpack.c.b16 %v727, %v727
  %v792 = vpack.c.b16 %v728, %v728
  %v793 = vpack.c.b16 %v729, %v729
  %v794 = vpack.c.b16 %v730, %v730
  %v795 = vpack.c.b16 %v731, %v731
  %v796 = vpack.c.b16 %v732, %v732
  %v797 = vpack.c.b16 %v733, %v733
  %v798 = vpack.c.b16 %v734, %v734
  %v799 = vpack.c.b16 %v735, %v735
  %v800 = vpack.c.b16 %v736, %v736
  %v801 = vpack.c.b16 %v737, %v737
  %v802 = vpack.c.b16 %v738, %v738
  %v803 = vpack.c.b16 %v739, %v739
  %v804 = vpack.c.b16 %v740, %v740
  %v805 = vpack.c.b16 %v741, %v741
  %v806 = vpack.c.b16 %v742, %v742
  %v807 = vpack.c.b16 %v743, %v743
  %v808 = vpack.c.b16 %v744, %v744
  %v809 = vpack.c.b16 %v745, %v745
  %v810 = vpack.c.b16 %v746, %v746
  %v811 = vpack.c.b16 %v747, %v747
  %v812 = vpack.c.b16 %v748, %v748
  %v813 = vpack.c.b16 %v749, %v749
  %v814 = vpack.c.b16 %v750, %v750
  %v815 = vpack.c.b16 %v751, %v751
  %v816 = vpack.c.b16 %v752, %v752
  %v817 = vpack.c.b16 %v753, %v753
  %v818 = vpack.c.b16 %v754, %v754
  %v819 = vpack.c.b16 %v755, %v755
  %v820 = vpack.c.b16 %v756, %v756
  %v821 = vpack.c.b16 %v757, %v757
  %v822 = vpack.c.b16 %v758, %v758
  %v823 = vpack.c.b16 %v759, %v759
  %v824 = vpack.c.b16 %v760, %v760
  %v825 = vpack.c.b16 %v761, %v761
  %v826 = vpack.c.b16 %v762, %v762
  %v827 = vpack.c.b16 %v763, %v763
  %v828 = vpack.c.b16 %v764, %v764
  %v829 = vpack.c.b16 %v765, %v765
  %v830 = vpack.c.b16 %v766, %v766
  %v831 = vpack.c.b16 %v767, %v767
  %v832 = vpack.c.b16 %v768, %v768
  %v833 = vpack.c.b16 %v769, %v769
  %v834 = vpack.c.b16 %v770, %v770
  %v835 = vpack.c.b16 %v771, %v771
  %v836 = vpack.c.b16 %v772, %v772
  %v837 = vpack.c.b16 %v773, %v773
  %v838 = vpack.c.b16 %v774, %v774
  %v839 = vpack.c.b16 %v775, %v775
  %v840 = vpack.c.b16 %v776, %v776
  %v841 = vpack.c.b16 %v777, %v777
  %v842 = vpack.c.b16 %v778, %v778
  %v843 = vpack.c.b16 %v779, %v779
  %v844 = vpack.c.b16 %v780, %v780
  %v845 = vpack.c.b16 %v781, %v781
  %vm910 = vcmask 257024
  %911 = vst.msk [vmem:[%s3] sm:$0xf] %vm910, %v782
  %912 = vst.msk [vmem:[%s3 + $0x4] sm:$0xf] %vm910, %v783
  %913 = vst.msk [vmem:[%s3 + $0x8] sm:$0xf] %vm910, %v784
  %914 = vst.msk [vmem:[%s3 + $0xc] sm:$0xf] %vm910, %v785
  %915 = vst.msk [vmem:[%s3 + $0x10] sm:$0xf] %vm910, %v786
  %916 = vst.msk [vmem:[%s3 + $0x14] sm:$0xf] %vm910, %v787
  %917 = vst.msk [vmem:[%s3 + $0x18] sm:$0xf] %vm910, %v788
  %918 = vst.msk [vmem:[%s3 + $0x1c] sm:$0xf] %vm910, %v789
  %919 = vst.msk [vmem:[%s3 + $0x20] sm:$0xf] %vm910, %v790
  %920 = vst.msk [vmem:[%s3 + $0x24] sm:$0xf] %vm910, %v791
  %921 = vst.msk [vmem:[%s3 + $0x28] sm:$0xf] %vm910, %v792
  %922 = vst.msk [vmem:[%s3 + $0x2c] sm:$0xf] %vm910, %v793
  %923 = vst.msk [vmem:[%s3 + $0x30] sm:$0xf] %vm910, %v794
  %924 = vst.msk [vmem:[%s3 + $0x34] sm:$0xf] %vm910, %v795
  %925 = vst.msk [vmem:[%s3 + $0x38] sm:$0xf] %vm910, %v796
  %926 = vst.msk [vmem:[%s3 + $0x3c] sm:$0xf] %vm910, %v797
  %927 = vst.msk [vmem:[%s3 + $0x40] sm:$0xf] %vm910, %v798
  %928 = vst.msk [vmem:[%s3 + $0x44] sm:$0xf] %vm910, %v799
  %929 = vst.msk [vmem:[%s3 + $0x48] sm:$0xf] %vm910, %v800
  %930 = vst.msk [vmem:[%s3 + $0x4c] sm:$0xf] %vm910, %v801
  %931 = vst.msk [vmem:[%s3 + $0x50] sm:$0xf] %vm910, %v802
  %932 = vst.msk [vmem:[%s3 + $0x54] sm:$0xf] %vm910, %v803
  %933 = vst.msk [vmem:[%s3 + $0x58] sm:$0xf] %vm910, %v804
  %934 = vst.msk [vmem:[%s3 + $0x5c] sm:$0xf] %vm910, %v805
  %935 = vst.msk [vmem:[%s3 + $0x60] sm:$0xf] %vm910, %v806
  %936 = vst.msk [vmem:[%s3 + $0x64] sm:$0xf] %vm910, %v807
  %937 = vst.msk [vmem:[%s3 + $0x68] sm:$0xf] %vm910, %v808
  %938 = vst.msk [vmem:[%s3 + $0x6c] sm:$0xf] %vm910, %v809
  %939 = vst.msk [vmem:[%s3 + $0x70] sm:$0xf] %vm910, %v810
  %940 = vst.msk [vmem:[%s3 + $0x74] sm:$0xf] %vm910, %v811
  %941 = vst.msk [vmem:[%s3 + $0x78] sm:$0xf] %vm910, %v812
  %942 = vst.msk [vmem:[%s3 + $0x7c] sm:$0xf] %vm910, %v813
  %943 = vst.msk [vmem:[%s3 + $0x80] sm:$0xf] %vm910, %v814
  %944 = vst.msk [vmem:[%s3 + $0x84] sm:$0xf] %vm910, %v815
  %945 = vst.msk [vmem:[%s3 + $0x88] sm:$0xf] %vm910, %v816
  %946 = vst.msk [vmem:[%s3 + $0x8c] sm:$0xf] %vm910, %v817
  %947 = vst.msk [vmem:[%s3 + $0x90] sm:$0xf] %vm910, %v818
  %948 = vst.msk [vmem:[%s3 + $0x94] sm:$0xf] %vm910, %v819
  %949 = vst.msk [vmem:[%s3 + $0x98] sm:$0xf] %vm910, %v820
  %950 = vst.msk [vmem:[%s3 + $0x9c] sm:$0xf] %vm910, %v821
  %951 = vst.msk [vmem:[%s3 + $0xa0] sm:$0xf] %vm910, %v822
  %952 = vst.msk [vmem:[%s3 + $0xa4] sm:$0xf] %vm910, %v823
  %953 = vst.msk [vmem:[%s3 + $0xa8] sm:$0xf] %vm910, %v824
  %954 = vst.msk [vmem:[%s3 + $0xac] sm:$0xf] %vm910, %v825
  %955 = vst.msk [vmem:[%s3 + $0xb0] sm:$0xf] %vm910, %v826
  %956 = vst.msk [vmem:[%s3 + $0xb4] sm:$0xf] %vm910, %v827
  %957 = vst.msk [vmem:[%s3 + $0xb8] sm:$0xf] %vm910, %v828
  %958 = vst.msk [vmem:[%s3 + $0xbc] sm:$0xf] %vm910, %v829
  %959 = vst.msk [vmem:[%s3 + $0xc0] sm:$0xf] %vm910, %v830
  %960 = vst.msk [vmem:[%s3 + $0xc4] sm:$0xf] %vm910, %v831
  %961 = vst.msk [vmem:[%s3 + $0xc8] sm:$0xf] %vm910, %v832
  %962 = vst.msk [vmem:[%s3 + $0xcc] sm:$0xf] %vm910, %v833
  %963 = vst.msk [vmem:[%s3 + $0xd0] sm:$0xf] %vm910, %v834
  %964 = vst.msk [vmem:[%s3 + $0xd4] sm:$0xf] %vm910, %v835
  %965 = vst.msk [vmem:[%s3 + $0xd8] sm:$0xf] %vm910, %v836
  %966 = vst.msk [vmem:[%s3 + $0xdc] sm:$0xf] %vm910, %v837
  %967 = vst.msk [vmem:[%s3 + $0xe0] sm:$0xf] %vm910, %v838
  %968 = vst.msk [vmem:[%s3 + $0xe4] sm:$0xf] %vm910, %v839
  %969 = vst.msk [vmem:[%s3 + $0xe8] sm:$0xf] %vm910, %v840
  %970 = vst.msk [vmem:[%s3 + $0xec] sm:$0xf] %vm910, %v841
  %971 = vst.msk [vmem:[%s3 + $0xf0] sm:$0xf] %vm910, %v842
  %972 = vst.msk [vmem:[%s3 + $0xf4] sm:$0xf] %vm910, %v843
  %973 = vst.msk [vmem:[%s3 + $0xf8] sm:$0xf] %vm910, %v844
  %974 = vst.msk [vmem:[%s3 + $0xfc] sm:$0xf] %vm910, %v845
  // Predicated region
  $region14: #{tpu_custom_call.1} parent=0 // pred_check
    _
  $region15: #{tpu_custom_call.1} parent=0 // pred_check_branch
    %976 = sbr.rel (0) target = $region17
  $region16: #{tpu_custom_call.1} parent=0 // pred_region
    _
  $region17: #{tpu_custom_call.1} parent=0 // pred_fallthru
    _
  // Predicated region
  $region18: #{tpu_custom_call.1} parent=0 // pred_check
    _
  $region19: #{tpu_custom_call.1} parent=0 // pred_check_branch
    %978 = sbr.rel (0) target = $region21
  $region20: #{tpu_custom_call.1} parent=0 // pred_region
    _
  $region21: #{tpu_custom_call.1} parent=0 // pred_fallthru
    _

</llo_original>
